<compile_context>
chip_gen: v7x
topology: tpu7x:2x2x1
jax: 0.10.0
libtpu: 0.0.40
codegen_flags: <defaults>
</compile_context>

<pallas_src>
import jax
import jax.numpy as jnp
from jax import lax
from jax.experimental import pallas as pl
from jax.experimental.pallas import tpu as pltpu  # noqa: F401  (kept for TPU-specific tuning hooks)

# ----------------------------- model config ---------------------------------
R = 4            # num_rows (batch)
F = 8            # num_fields
D_IN = 16        # field_input_size
O = 8            # field_output_size
H = 2            # num_heads
HO = O * H       # flattened output features per field
LRELU_SLOPE = 0.01
LN_EPS = 1e-5


# ------------------------------ Pallas kernel --------------------------------
def attn_interaction_kernel(x_ref, w_ref, g_ref, o_ref):
    # x_ref: (R, F*D) lane-dense; w_ref: (F*D, F*HO) block-diagonal effective weight;
    # g_ref: (F*HO, F*HO) block-constant group-mean matrix; o_ref: (R, F*HO).
    x = x_ref[...]
    w = w_ref[...]
    g = g_ref[...]

    # One MXU matmul covers V-projection + residual projection for all fields.
    y = jnp.dot(x, w, preferred_element_type=jnp.float32)          # (R, F*HO)
    # leaky_relu (default negative_slope = 0.01)
    y = jnp.where(y >= 0, y, LRELU_SLOPE * y)

    # Per-field LayerNorm (weight=1, bias=0, biased variance) via group-averaging
    # matmuls: mu / var are broadcast per 16-lane field group, no cross-lane XLU ops.
    mu = jnp.dot(y, g, preferred_element_type=jnp.float32)          # per-group mean
    c = y - mu
    var = jnp.dot(c * c, g, preferred_element_type=jnp.float32)     # per-group E[(y-mu)^2]
    o_ref[...] = (c * lax.rsqrt(var + LN_EPS)).astype(o_ref.dtype)


# ------------------------------ wrapper ---------------------------------------
def attn_interaction_forward(x, W_q, W_k, W_v, W_r):
    """x: (R, F, D); W_q/k/v: (D, O, H); W_r: (D, O*H).  Returns (R, F, O*H)."""
    del W_q, W_k  # provably do not affect the output (see header comment)
    r, f, d = x.shape
    ho = W_r.shape[-1]

    # Effective per-field weight in PyTorch (o*H + h) column order (pre-summed:
    # x @ Wv_flat + x @ Wr == x @ (Wv_flat + Wr)).
    w_eff = W_v.reshape(d, ho).astype(jnp.float32) + W_r.astype(jnp.float32)   # (D, HO)
    # Block-diagonal expansion: one matmul handles all F fields, output already in
    # the final flattened column order (f*HO + o*H + h).
    w_big = jnp.kron(jnp.eye(f, dtype=jnp.float32), w_eff)                     # (F*D, F*HO)
    # Group-averaging matrix for per-field LayerNorm statistics.
    g_mat = jnp.kron(jnp.eye(f, dtype=jnp.float32),
                     jnp.full((ho, ho), 1.0 / ho, dtype=jnp.float32))          # (F*HO, F*HO)

    x_flat = x.reshape(r, f * d)   # (R, F*D), free row-major reshape

    y_flat = pl.pallas_call(
        attn_interaction_kernel,
        out_shape=jax.ShapeDtypeStruct((r, f * ho), x.dtype),
        grid=(1,),  # whole (tiny) batch in one invocation
        in_specs=[
            pl.BlockSpec((r, f * d), lambda i: (0, 0)),
            pl.BlockSpec((f * d, f * ho), lambda i: (0, 0)),
            pl.BlockSpec((f * ho, f * ho), lambda i: (0, 0)),
        ],
        out_specs=pl.BlockSpec((r, f * ho), lambda i: (0, 0)),
    )(x_flat, w_big, g_mat)

    return y_flat.reshape(r, f, ho)   # free reshape, no transpose needed


# --------------------------- pure-JAX reference -------------------------------
def reference_forward(x, W_q, W_k, W_v, W_r):
    r, f, _ = x.shape
    qrys = jnp.einsum('rfi,ioh->rfoh', x, W_q)
    keys = jnp.einsum('rfi,ioh->rfoh', x, W_k)
    vals = jnp.einsum('rfi,ioh->rfoh', x, W_v)
    rsdl = jnp.einsum('rfi,ij->rfj', x, W_r)
    product = jnp.einsum('rdoh,rfoh->rdfh', qrys, keys)
    alpha = jax.nn.softmax(product, axis=2)
    out = jnp.einsum('rfdh,rfoh->rfoh', alpha, vals)
    out = out.reshape(r, f, -1) + rsdl
    out = jnp.where(out >= 0, out, LRELU_SLOPE * out)
    mu = out.mean(-1, keepdims=True)
    var = ((out - mu) ** 2).mean(-1, keepdims=True)
    return (out - mu) / jnp.sqrt(var + LN_EPS)


# ----------------------------- main ------------------------------------------
if __name__ == "__main__":
    key = jax.random.PRNGKey(0)
    kx, kq, kk, kv, kr = jax.random.split(key, 5)

    x = jax.random.normal(kx, (R, F, D_IN), dtype=jnp.float32)

    # Deterministic kaiming_uniform_-style init (bound = sqrt(6 / fan_in)).
    def kaiming_uniform(k, shape, fan_in):
        bound = (6.0 / fan_in) ** 0.5
        return jax.random.uniform(k, shape, jnp.float32, -bound, bound)

    W_q = kaiming_uniform(kq, (D_IN, O, H), O * H)
    W_k = kaiming_uniform(kk, (D_IN, O, H), O * H)
    W_v = kaiming_uniform(kv, (D_IN, O, H), O * H)
    W_r = kaiming_uniform(kr, (D_IN, O * H), O * H)

    y = attn_interaction_forward(x, W_q, W_k, W_v, W_r)
    y = jax.block_until_ready(y)

    y_ref = reference_forward(x, W_q, W_k, W_v, W_r)
    assert y.shape == (R, F, O * H)
    assert jnp.allclose(y, y_ref, atol=1e-4, rtol=1e-4), "mismatch vs reference"

    print("KERNEL_OK")
</pallas_src>

<mosaic_0001>
module attributes {stable_mosaic.version = 11 : i64} {
  func.func @attn_interaction_kernel(%arg0: i32, %arg1: memref<4x128xf32, #tpu.memory_space<vmem>>, %arg2: memref<128x128xf32, #tpu.memory_space<vmem>>, %arg3: memref<128x128xf32, #tpu.memory_space<vmem>>, %arg4: memref<4x128xf32, #tpu.memory_space<vmem>>) attributes {dimension_semantics = [#tpu.dimension_semantics<arbitrary>], iteration_bounds = array<i64: 1>, scalar_prefetch = 0 : i64, scratch_operands = 0 : i64, tpu.core_type = #tpu.core_type<tc>, window_params = [{pipeline_mode = #tpu.pipeline_mode<synchronous>, transform_indices = @transform_0, window_bounds = array<i64: 4, 128>}, {pipeline_mode = #tpu.pipeline_mode<synchronous>, transform_indices = @transform_1, window_bounds = array<i64: 128, 128>}, {pipeline_mode = #tpu.pipeline_mode<synchronous>, transform_indices = @transform_2, window_bounds = array<i64: 128, 128>}, {pipeline_mode = #tpu.pipeline_mode<synchronous>, transform_indices = @transform_3, window_bounds = array<i64: 4, 128>}]} {
    %c0 = arith.constant 0 : index
    %c0_0 = arith.constant 0 : index
    %0 = vector.load %arg1[%c0, %c0_0] : memref<4x128xf32, #tpu.memory_space<vmem>>, vector<4x128xf32>
    %c0_1 = arith.constant 0 : index
    %c0_2 = arith.constant 0 : index
    %1 = vector.load %arg2[%c0_1, %c0_2] : memref<128x128xf32, #tpu.memory_space<vmem>>, vector<128x128xf32>
    %c0_3 = arith.constant 0 : index
    %c0_4 = arith.constant 0 : index
    %2 = vector.load %arg3[%c0_3, %c0_4] : memref<128x128xf32, #tpu.memory_space<vmem>>, vector<128x128xf32>
    %cst = arith.constant dense<0.000000e+00> : vector<4x128xf32>
    %3 = tpu.matmul %0, %1, %cst {dimension_numbers = #tpu.dot_dimension_numbers<[1], [0], [0], [1], [0, 0, 1, 1], [], []>} : vector<4x128xf32>, vector<128x128xf32>, vector<4x128xf32> -> vector<4x128xf32>
    %cst_5 = arith.constant 0.000000e+00 : f32
    %4 = vector.broadcast %cst_5 : f32 to vector<4x128xf32>
    %5 = arith.cmpf oge, %3, %4 : vector<4x128xf32>
    %cst_6 = arith.constant 0.00999999977 : f32
    %6 = vector.broadcast %cst_6 : f32 to vector<4x128xf32>
    %7 = arith.mulf %6, %3 : vector<4x128xf32>
    %8 = arith.select %5, %3, %7 : vector<4x128xi1>, vector<4x128xf32>
    %cst_7 = arith.constant dense<0.000000e+00> : vector<4x128xf32>
    %9 = tpu.matmul %8, %2, %cst_7 {dimension_numbers = #tpu.dot_dimension_numbers<[1], [0], [0], [1], [0, 0, 1, 1], [], []>} : vector<4x128xf32>, vector<128x128xf32>, vector<4x128xf32> -> vector<4x128xf32>
    %10 = arith.subf %8, %9 : vector<4x128xf32>
    %11 = arith.mulf %10, %10 : vector<4x128xf32>
    %cst_8 = arith.constant dense<0.000000e+00> : vector<4x128xf32>
    %12 = tpu.matmul %11, %2, %cst_8 {dimension_numbers = #tpu.dot_dimension_numbers<[1], [0], [0], [1], [0, 0, 1, 1], [], []>} : vector<4x128xf32>, vector<128x128xf32>, vector<4x128xf32> -> vector<4x128xf32>
    %cst_9 = arith.constant 9.99999974E-6 : f32
    %13 = vector.broadcast %cst_9 : f32 to vector<4x128xf32>
    %14 = arith.addf %12, %13 : vector<4x128xf32>
    %15 = math.rsqrt %14 : vector<4x128xf32>
    %16 = arith.mulf %10, %15 : vector<4x128xf32>
    %c0_10 = arith.constant 0 : index
    %c0_11 = arith.constant 0 : index
    %17 = vector.load %arg4[%c0_10, %c0_11] : memref<4x128xf32, #tpu.memory_space<vmem>>, vector<4x128xf32>
    tpu.vector_store %arg4[%c0_10, %c0_11], %16 {strides = array<i32>} : memref<4x128xf32, #tpu.memory_space<vmem>>, vector<4x128xf32>,
    return
  }
  func.func @transform_0(%arg0: i32) -> (i32, i32) {
    %c0_i32 = arith.constant 0 : i32
    %c0_i32_0 = arith.constant 0 : i32
    %c0_i32_1 = arith.constant 0 : i32
    return %c0_i32, %c0_i32_0 : i32, i32
  }
  func.func @transform_1(%arg0: i32) -> (i32, i32) {
    %c0_i32 = arith.constant 0 : i32
    %c0_i32_0 = arith.constant 0 : i32
    %c0_i32_1 = arith.constant 0 : i32
    return %c0_i32, %c0_i32_0 : i32, i32
  }
  func.func @transform_2(%arg0: i32) -> (i32, i32) {
    %c0_i32 = arith.constant 0 : i32
    %c0_i32_0 = arith.constant 0 : i32
    %c0_i32_1 = arith.constant 0 : i32
    return %c0_i32, %c0_i32_0 : i32, i32
  }
  func.func @transform_3(%arg0: i32) -> (i32, i32) {
    %c0_i32 = arith.constant 0 : i32
    %c0_i32_0 = arith.constant 0 : i32
    %c0_i32_1 = arith.constant 0 : i32
    return %c0_i32, %c0_i32_0 : i32, i32
  }
}

</mosaic_0001>

<llo_original>
// kernel: tpu_custom_call.1
$region0: #{tpu_custom_call.1}
  #allocation0 [shape = 'u32[]', space=smem, size = 0x4, offset = 0x4, fixed_abs, tag = 'smem constant byte address 0x4 - core index']
  #allocation1 [shape = 'u32[144,128]{1,0:T(1,128)}', space=vmem, size = 0x12000, scoped, tag = 'internal scratch']
  %s0 = inlined_call_operand.hbm [shape: f32[4,128], index: 0, kind: input, shape index: {}]
  %s1 = inlined_call_operand.hbm [shape: f32[128,128], index: 1, kind: input, shape index: {}]
  %s2 = inlined_call_operand.hbm [shape: f32[128,128], index: 2, kind: input, shape index: {}]
  %s3 = inlined_call_operand.hbm [shape: f32[4,128], index: 3, kind: output, shape index: {}]
  %s4 = sld [smem:[#allocation0]]
  $region34: #{tpu_custom_call.1} parent=0
    _
  %s6 = ssub.s32 1, %s4
  %s7 = scalar_select 0, %s6, %s4
  $region1: #{tpu_custom_call.1} parent=0
    #allocation2 [shape = 'u8[2048]{0}', space=vmem, size = 0x800, scoped, tag = 'input window, operand 0, single buffered']
    #allocation3 [shape = 's32[1]{0}', space=sflag, size = 0x4, scoped, tag = 'scoped memory for tpu_custom_call.1']
    #allocation4 [shape = 's32[1]{0}', space=sflag, size = 0x4, scoped, tag = 'scoped memory for tpu_custom_call.1']
    #allocation5 [shape = 'u8[65536]{0}', space=vmem, size = 0x10000, scoped, tag = 'input window, operand 1, single buffered']
    #allocation6 [shape = 's32[1]{0}', space=sflag, size = 0x4, scoped, tag = 'scoped memory for tpu_custom_call.1']
    #allocation7 [shape = 'u8[65536]{0}', space=vmem, size = 0x10000, scoped, tag = 'input window, operand 2, single buffered']
    #allocation8 [shape = 'u8[2048]{0}', space=vmem, size = 0x800, scoped, tag = 'output window, operand 0, single buffered']
    %8 = vsyncpa [#allocation3], 0
    %9 = vsyncpa [#allocation6], 0
    %10 = vsyncpa [#allocation4], 0
    // Predicated region
    $region2: #{tpu_custom_call.1} parent=1 // pred_check
      _
    $region3: #{tpu_custom_call.1} parent=1 // pred_check_branch
      %12 = sbr.rel (0) target = $region5
    $region4: #{tpu_custom_call.1} parent=1 // pred_region
      %s14 = ssub.s32 64, 64
      %15 = vsyncadd [#allocation3], %s14
      %s17 = sshll.u32 [#allocation2], 4
      %s18 = int_to_ptr.vmem [resolvable:$true] %s17
      %20 = dma.hbm_to_vmem [thread:$0]  %s0, 64, %s18, [#allocation3]
    $region5: #{tpu_custom_call.1} parent=1 // pred_fallthru
      _
    // Predicated region
    $region6: #{tpu_custom_call.1} parent=1 // pred_check
      _
    $region7: #{tpu_custom_call.1} parent=1 // pred_check_branch
      %22 = sbr.rel (0) target = $region9
    $region8: #{tpu_custom_call.1} parent=1 // pred_region
      %s24 = ssub.s32 2048, 2048
      %25 = vsyncadd [#allocation6], %s24
      %s26 = sshll.u32 [#allocation5], 4
      %s27 = int_to_ptr.vmem [resolvable:$true] %s26
      %32 = dma.hbm_to_vmem [thread:$0]  %s1, 2048, %s27, [#allocation6], 128, 128, 8
    $region9: #{tpu_custom_call.1} parent=1 // pred_fallthru
      _
    // Predicated region
    $region10: #{tpu_custom_call.1} parent=1 // pred_check
      _
    $region11: #{tpu_custom_call.1} parent=1 // pred_check_branch
      %34 = sbr.rel (0) target = $region13
    $region12: #{tpu_custom_call.1} parent=1 // pred_region
      %s36 = ssub.s32 2048, 2048
      %37 = vsyncadd [#allocation6], %s36
      %s38 = sshll.u32 [#allocation7], 4
      %s39 = int_to_ptr.vmem [resolvable:$true] %s38
      %44 = dma.hbm_to_vmem [thread:$0]  %s2, 2048, %s39, [#allocation6], 128, 128, 8
    $region13: #{tpu_custom_call.1} parent=1 // pred_fallthru
      _
    // Predicated region
    $region14: #{tpu_custom_call.1} parent=1 // pred_check
      _
    $region15: #{tpu_custom_call.1} parent=1 // pred_check_branch
      %46 = sbr.rel (0) target = $region17
    $region16: #{tpu_custom_call.1} parent=1 // pred_region
      %47 = dma.done [#allocation3], 64
    $region17: #{tpu_custom_call.1} parent=1 // pred_fallthru
      _
    // Predicated region
    $region18: #{tpu_custom_call.1} parent=1 // pred_check
      _
    $region19: #{tpu_custom_call.1} parent=1 // pred_check_branch
      %49 = sbr.rel (0) target = $region21
    $region20: #{tpu_custom_call.1} parent=1 // pred_region
      %50 = dma.done [#allocation6], 2048
    $region21: #{tpu_custom_call.1} parent=1 // pred_fallthru
      _
    // Predicated region
    $region22: #{tpu_custom_call.1} parent=1 // pred_check
      _
    $region23: #{tpu_custom_call.1} parent=1 // pred_check_branch
      %52 = sbr.rel (0) target = $region25
    $region24: #{tpu_custom_call.1} parent=1 // pred_region
      %53 = dma.done [#allocation6], 2048
    $region25: #{tpu_custom_call.1} parent=1 // pred_fallthru
      _
    %v54 = vld [vmem:[#allocation2] sm:$0xf]
    %v55 = vld [vmem:[#allocation5] sm:$0xff]
    %v56 = vld [vmem:[#allocation5 + $0x8] sm:$0xff]
    %v57 = vld [vmem:[#allocation5 + $0x10] sm:$0xff]
    %v58 = vld [vmem:[#allocation5 + $0x18] sm:$0xff]
    %v59 = vld [vmem:[#allocation5 + $0x20] sm:$0xff]
    %v60 = vld [vmem:[#allocation5 + $0x28] sm:$0xff]
    %v61 = vld [vmem:[#allocation5 + $0x30] sm:$0xff]
    %v62 = vld [vmem:[#allocation5 + $0x38] sm:$0xff]
    %v63 = vld [vmem:[#allocation5 + $0x40] sm:$0xff]
    %v64 = vld [vmem:[#allocation5 + $0x48] sm:$0xff]
    %v65 = vld [vmem:[#allocation5 + $0x50] sm:$0xff]
    %v66 = vld [vmem:[#allocation5 + $0x58] sm:$0xff]
    %v67 = vld [vmem:[#allocation5 + $0x60] sm:$0xff]
    %v68 = vld [vmem:[#allocation5 + $0x68] sm:$0xff]
    %v69 = vld [vmem:[#allocation5 + $0x70] sm:$0xff]
    %v70 = vld [vmem:[#allocation5 + $0x78] sm:$0xff]
    %v71 = vld [vmem:[#allocation7] sm:$0xff]
    %v72 = vld [vmem:[#allocation7 + $0x8] sm:$0xff]
    %v73 = vld [vmem:[#allocation7 + $0x10] sm:$0xff]
    %v74 = vld [vmem:[#allocation7 + $0x18] sm:$0xff]
    %v75 = vld [vmem:[#allocation7 + $0x20] sm:$0xff]
    %v76 = vld [vmem:[#allocation7 + $0x28] sm:$0xff]
    %v77 = vld [vmem:[#allocation7 + $0x30] sm:$0xff]
    %v78 = vld [vmem:[#allocation7 + $0x38] sm:$0xff]
    %v79 = vld [vmem:[#allocation7 + $0x40] sm:$0xff]
    %v80 = vld [vmem:[#allocation7 + $0x48] sm:$0xff]
    %v81 = vld [vmem:[#allocation7 + $0x50] sm:$0xff]
    %v82 = vld [vmem:[#allocation7 + $0x58] sm:$0xff]
    %v83 = vld [vmem:[#allocation7 + $0x60] sm:$0xff]
    %v84 = vld [vmem:[#allocation7 + $0x68] sm:$0xff]
    %v85 = vld [vmem:[#allocation7 + $0x70] sm:$0xff]
    %v86 = vld [vmem:[#allocation7 + $0x78] sm:$0xff]
    %87 = vmatprep.subr.mxu0 0.0
    %88 = vmatpush1.msra.mxu0 %v55
    %89 = vmatprep.subr.mxu0 0.0
    %90 = vmatpush1.msra.mxu0 %v56
    %91 = vmatprep.subr.mxu0 0.0
    %92 = vmatpush1.msra.mxu0 %v57
    %93 = vmatprep.subr.mxu0 0.0
    %94 = vmatpush1.msra.mxu0 %v58
    %95 = vmatprep.subr.mxu0 0.0
    %96 = vmatpush1.msra.mxu0 %v59
    %97 = vmatprep.subr.mxu0 0.0
    %98 = vmatpush1.msra.mxu0 %v60
    %99 = vmatprep.subr.mxu0 0.0
    %100 = vmatpush1.msra.mxu0 %v61
    %101 = vmatprep.subr.mxu0 0.0
    %102 = vmatpush1.msra.mxu0 %v62
    %103 = vmatprep.subr.mxu0 0.0
    %104 = vmatpush1.msra.mxu0 %v63
    %105 = vmatprep.subr.mxu0 0.0
    %106 = vmatpush1.msra.mxu0 %v64
    %107 = vmatprep.subr.mxu0 0.0
    %108 = vmatpush1.msra.mxu0 %v65
    %109 = vmatprep.subr.mxu0 0.0
    %110 = vmatpush1.msra.mxu0 %v66
    %111 = vmatprep.subr.mxu0 0.0
    %112 = vmatpush1.msra.mxu0 %v67
    %113 = vmatprep.subr.mxu0 0.0
    %114 = vmatpush1.msra.mxu0 %v68
    %115 = vmatprep.subr.mxu0 0.0
    %116 = vmatpush1.msra.mxu0 %v69
    %117 = vmatprep.subr.mxu0 0.0
    %118 = vmatpush1.msra.mxu0 %v70
    %119 = vmatprep.subr.mxu0 0.0
    %120 = vmatpush1.msra.mxu0 0.0
    %121 = vmatprep.subr.mxu0 0.0
    %122 = vmatpush1.msra.mxu0 0.0
    %123 = vmatprep.subr.mxu0 0.0
    %124 = vmatpush1.msra.mxu0 0.0
    %125 = vmatprep.subr.mxu0 0.0
    %126 = vmatpush1.msra.mxu0 0.0
    %127 = vmatprep.subr.mxu0 0.0
    %128 = vmatpush1.msra.mxu0 0.0
    %129 = vmatprep.subr.mxu0 0.0
    %130 = vmatpush1.msra.mxu0 0.0
    %131 = vmatprep.subr.mxu0 0.0
    %132 = vmatpush1.msra.mxu0 0.0
    %133 = vmatprep.subr.mxu0 0.0
    %134 = vmatpush1.msra.mxu0 0.0
    %135 = vmatprep.subr.mxu0 0.0
    %136 = vmatpush1.msra.mxu0 0.0
    %137 = vmatprep.subr.mxu0 0.0
    %138 = vmatpush1.msra.mxu0 0.0
    %139 = vmatprep.subr.mxu0 0.0
    %140 = vmatpush1.msra.mxu0 0.0
    %141 = vmatprep.subr.mxu0 0.0
    %142 = vmatpush1.msra.mxu0 0.0
    %143 = vmatprep.subr.mxu0 0.0
    %144 = vmatpush1.msra.mxu0 0.0
    %145 = vmatprep.subr.mxu0 0.0
    %146 = vmatpush1.msra.mxu0 0.0
    %147 = vmatprep.subr.mxu0 0.0
    %148 = vmatpush1.msra.mxu0 0.0
    %149 = vmatprep.subr.mxu0 0.0
    %150 = vmatpush1.msra.mxu0 0.0
    %151 = vmatprep.mubr.f32.mxu0 0.0
    %152 = vmatmul.mubr.f32.gmra.mrb[0].mxu0 %v54
    %v153 = vpop.f32.mrb[0].mxu0
    %v154 = vadd.f32 0.0, %v153
    %v155 = vpop.f32.mrb[0].mxu0
    %156 = vdwg.mxu0
    %vm157 = vcmp.ge.f32.partialorder %v154, 0.0
    %v158 = vmul.f32 %v154, 0.01
    %v159 = vsel %vm157, %v154, %v158
    %160 = vmatprep.subr.mxu0 0.0
    %161 = vmatpush1.msra.mxu0 %v71
    %162 = vmatprep.subr.mxu0 0.0
    %163 = vmatpush1.msra.mxu0 %v72
    %164 = vmatprep.subr.mxu0 0.0
    %165 = vmatpush1.msra.mxu0 %v73
    %166 = vmatprep.subr.mxu0 0.0
    %167 = vmatpush1.msra.mxu0 %v74
    %168 = vmatprep.subr.mxu0 0.0
    %169 = vmatpush1.msra.mxu0 %v75
    %170 = vmatprep.subr.mxu0 0.0
    %171 = vmatpush1.msra.mxu0 %v76
    %172 = vmatprep.subr.mxu0 0.0
    %173 = vmatpush1.msra.mxu0 %v77
    %174 = vmatprep.subr.mxu0 0.0
    %175 = vmatpush1.msra.mxu0 %v78
    %176 = vmatprep.subr.mxu0 0.0
    %177 = vmatpush1.msra.mxu0 %v79
    %178 = vmatprep.subr.mxu0 0.0
    %179 = vmatpush1.msra.mxu0 %v80
    %180 = vmatprep.subr.mxu0 0.0
    %181 = vmatpush1.msra.mxu0 %v81
    %182 = vmatprep.subr.mxu0 0.0
    %183 = vmatpush1.msra.mxu0 %v82
    %184 = vmatprep.subr.mxu0 0.0
    %185 = vmatpush1.msra.mxu0 %v83
    %186 = vmatprep.subr.mxu0 0.0
    %187 = vmatpush1.msra.mxu0 %v84
    %188 = vmatprep.subr.mxu0 0.0
    %189 = vmatpush1.msra.mxu0 %v85
    %190 = vmatprep.subr.mxu0 0.0
    %191 = vmatpush1.msra.mxu0 %v86
    %192 = vmatprep.subr.mxu0 0.0
    %193 = vmatpush1.msra.mxu0 0.0
    %194 = vmatprep.subr.mxu0 0.0
    %195 = vmatpush1.msra.mxu0 0.0
    %196 = vmatprep.subr.mxu0 0.0
    %197 = vmatpush1.msra.mxu0 0.0
    %198 = vmatprep.subr.mxu0 0.0
    %199 = vmatpush1.msra.mxu0 0.0
    %200 = vmatprep.subr.mxu0 0.0
    %201 = vmatpush1.msra.mxu0 0.0
    %202 = vmatprep.subr.mxu0 0.0
    %203 = vmatpush1.msra.mxu0 0.0
    %204 = vmatprep.subr.mxu0 0.0
    %205 = vmatpush1.msra.mxu0 0.0
    %206 = vmatprep.subr.mxu0 0.0
    %207 = vmatpush1.msra.mxu0 0.0
    %208 = vmatprep.subr.mxu0 0.0
    %209 = vmatpush1.msra.mxu0 0.0
    %210 = vmatprep.subr.mxu0 0.0
    %211 = vmatpush1.msra.mxu0 0.0
    %212 = vmatprep.subr.mxu0 0.0
    %213 = vmatpush1.msra.mxu0 0.0
    %214 = vmatprep.subr.mxu0 0.0
    %215 = vmatpush1.msra.mxu0 0.0
    %216 = vmatprep.subr.mxu0 0.0
    %217 = vmatpush1.msra.mxu0 0.0
    %218 = vmatprep.subr.mxu0 0.0
    %219 = vmatpush1.msra.mxu0 0.0
    %220 = vmatprep.subr.mxu0 0.0
    %221 = vmatpush1.msra.mxu0 0.0
    %222 = vmatprep.subr.mxu0 0.0
    %223 = vmatpush1.msra.mxu0 0.0
    %224 = vmatprep.mubr.f32.mxu0 0.0
    %225 = vmatmul.mubr.f32.gmra.mrb[0].mxu0 %v159
    %v226 = vpop.f32.mrb[0].mxu0
    %v227 = vadd.f32 0.0, %v226
    %v228 = vpop.f32.mrb[0].mxu0
    %229 = vdwg.mxu0
    %v230 = vsub.f32 %v159, %v227
    %v231 = vmul.f32 %v230, %v230
    %232 = vmatprep.subr.mxu0 0.0
    %233 = vmatpush1.msra.mxu0 %v71
    %234 = vmatprep.subr.mxu0 0.0
    %235 = vmatpush1.msra.mxu0 %v72
    %236 = vmatprep.subr.mxu0 0.0
    %237 = vmatpush1.msra.mxu0 %v73
    %238 = vmatprep.subr.mxu0 0.0
    %239 = vmatpush1.msra.mxu0 %v74
    %240 = vmatprep.subr.mxu0 0.0
    %241 = vmatpush1.msra.mxu0 %v75
    %242 = vmatprep.subr.mxu0 0.0
    %243 = vmatpush1.msra.mxu0 %v76
    %244 = vmatprep.subr.mxu0 0.0
    %245 = vmatpush1.msra.mxu0 %v77
    %246 = vmatprep.subr.mxu0 0.0
    %247 = vmatpush1.msra.mxu0 %v78
    %248 = vmatprep.subr.mxu0 0.0
    %249 = vmatpush1.msra.mxu0 %v79
    %250 = vmatprep.subr.mxu0 0.0
    %251 = vmatpush1.msra.mxu0 %v80
    %252 = vmatprep.subr.mxu0 0.0
    %253 = vmatpush1.msra.mxu0 %v81
    %254 = vmatprep.subr.mxu0 0.0
    %255 = vmatpush1.msra.mxu0 %v82
    %256 = vmatprep.subr.mxu0 0.0
    %257 = vmatpush1.msra.mxu0 %v83
    %258 = vmatprep.subr.mxu0 0.0
    %259 = vmatpush1.msra.mxu0 %v84
    %260 = vmatprep.subr.mxu0 0.0
    %261 = vmatpush1.msra.mxu0 %v85
    %262 = vmatprep.subr.mxu0 0.0
    %263 = vmatpush1.msra.mxu0 %v86
    %264 = vmatprep.subr.mxu0 0.0
    %265 = vmatpush1.msra.mxu0 0.0
    %266 = vmatprep.subr.mxu0 0.0
    %267 = vmatpush1.msra.mxu0 0.0
    %268 = vmatprep.subr.mxu0 0.0
    %269 = vmatpush1.msra.mxu0 0.0
    %270 = vmatprep.subr.mxu0 0.0
    %271 = vmatpush1.msra.mxu0 0.0
    %272 = vmatprep.subr.mxu0 0.0
    %273 = vmatpush1.msra.mxu0 0.0
    %274 = vmatprep.subr.mxu0 0.0
    %275 = vmatpush1.msra.mxu0 0.0
    %276 = vmatprep.subr.mxu0 0.0
    %277 = vmatpush1.msra.mxu0 0.0
    %278 = vmatprep.subr.mxu0 0.0
    %279 = vmatpush1.msra.mxu0 0.0
    %280 = vmatprep.subr.mxu0 0.0
    %281 = vmatpush1.msra.mxu0 0.0
    %282 = vmatprep.subr.mxu0 0.0
    %283 = vmatpush1.msra.mxu0 0.0
    %284 = vmatprep.subr.mxu0 0.0
    %285 = vmatpush1.msra.mxu0 0.0
    %286 = vmatprep.subr.mxu0 0.0
    %287 = vmatpush1.msra.mxu0 0.0
    %288 = vmatprep.subr.mxu0 0.0
    %289 = vmatpush1.msra.mxu0 0.0
    %290 = vmatprep.subr.mxu0 0.0
    %291 = vmatpush1.msra.mxu0 0.0
    %292 = vmatprep.subr.mxu0 0.0
    %293 = vmatpush1.msra.mxu0 0.0
    %294 = vmatprep.subr.mxu0 0.0
    %295 = vmatpush1.msra.mxu0 0.0
    %296 = vmatprep.mubr.f32.mxu0 0.0
    %297 = vmatmul.mubr.f32.gmra.mrb[0].mxu0 %v231
    %v298 = vpop.f32.mrb[0].mxu0
    %v299 = vadd.f32 1e-05, %v298
    %v300 = vpop.f32.mrb[0].mxu0
    %301 = vdwg.mxu0
    %v302 = vrsqrt.pop %v299
    %v303 = vmul.f32 %v230, %v302
    %304 = vst [vmem:[#allocation8] sm:$0xf] %v303
    // Predicated region
    $region26: #{tpu_custom_call.1} parent=1 // pred_check
      _
    $region27: #{tpu_custom_call.1} parent=1 // pred_check_branch
      %306 = sbr.rel (0) target = $region29
    $region28: #{tpu_custom_call.1} parent=1 // pred_region
      %s308 = ssub.s32 64, 64
      %309 = vsyncadd [#allocation4], %s308
      %s311 = sshll.u32 [#allocation8], 4
      %s312 = int_to_ptr.vmem [resolvable:$true] %s311
      %314 = dma.vmem_to_hbm [thread:$0]  %s312, 64, %s3, [#allocation4]
    $region29: #{tpu_custom_call.1} parent=1 // pred_fallthru
      _
    // Predicated region
    $region30: #{tpu_custom_call.1} parent=1 // pred_check
      _
    $region31: #{tpu_custom_call.1} parent=1 // pred_check_branch
      %316 = sbr.rel (0) target = $region33
    $region32: #{tpu_custom_call.1} parent=1 // pred_region
      %317 = dma.done [#allocation4], 64
    $region33: #{tpu_custom_call.1} parent=1 // pred_fallthru
      _
    %318 = vsyncpa [#allocation3], 1
    %319 = vsyncpa [#allocation6], 1
    %320 = vsyncpa [#allocation4], 1

</llo_original>
